<compile_context>
chip_gen: v5e
topology: v5e:2x2
jax: 0.10.0
libtpu: 0.0.40
codegen_flags: <defaults>
</compile_context>

<pallas_src>
import jax
import jax.numpy as jnp
from jax.experimental import pallas as pl
from jax.experimental.pallas import tpu as pltpu

_SUBLANE = 8


def _round_up(x, m):
    return ((x + m - 1) // m) * m


def _pick_row_tile(B, block_rows):
    """Row tile: multiple of 8 sublanes, <= block_rows, and capped so the grid
    has >= 2 steps whenever B > 8 (lets v7x's second TensorCore share the
    'parallel' batch axis; no-op on single-TC v5e/v6e)."""
    if B <= _SUBLANE:
        return _SUBLANE
    half = _round_up(pl.cdiv(B, 2), _SUBLANE)
    return max(_SUBLANE, min(block_rows, half))


# ---------------------------------------------------------------------------
# Fast kernel: softmax over a size-1 dim == 1.0 and head layers have no bias,
# so every output row equals the corresponding head-weight row.  Pure
# sublane-broadcast + store, exact-width outputs (no padded slab).
# ---------------------------------------------------------------------------
def _heads_broadcast_kernel(wf_ref, ws_ref, of_ref, os_ref):
    of_ref[...] = jnp.broadcast_to(wf_ref[...], of_ref.shape)
    os_ref[...] = jnp.broadcast_to(ws_ref[...], os_ref.shape)


# ---------------------------------------------------------------------------
# Faithful fully-fused MLP kernel (kept for validation / general case).
# ---------------------------------------------------------------------------
def _moment_model_mlp_kernel(obs_ref, w1_ref, b1_ref, w2_ref, b2_ref,
                             wl_ref, bl_ref, wf_ref, ws_ref,
                             of_ref, os_ref):
    # obs crosses HBM as f32 (single read, no wrapper-side convert); cast to
    # bf16 on-chip so the MXU sees its native input width.
    x = obs_ref[...].astype(jnp.bfloat16)
    a1 = jnp.tanh(
        jnp.dot(x, w1_ref[...], preferred_element_type=jnp.float32) + b1_ref[...]
    )
    a2 = jnp.tanh(
        jnp.dot(a1.astype(jnp.bfloat16), w2_ref[...],
                preferred_element_type=jnp.float32) + b2_ref[...]
    )
    # Width-1 logit: VPU multiply + cross-lane reduce (XLU slot) instead of an
    # MXU push that would fill 1/256 of the output width.
    logit = jnp.sum(a2 * wl_ref[...], axis=-1, keepdims=True) + bl_ref[0]
    # Softmax over axis=1 (width == amount_possible_states).  Exact division;
    # for width 1 this is identically 1.0, so the outputs are exact.
    m = jnp.max(logit, axis=1, keepdims=True)
    e = jnp.exp(logit - m)
    sm = e / jnp.sum(e, axis=1, keepdims=True)
    # (rows,1) x (1,n) outer products as VPU broadcast-multiplies.
    of_ref[...] = (sm * wf_ref[...]).astype(of_ref.dtype)
    os_ref[...] = (sm * ws_ref[...]).astype(os_ref.dtype)


# ---------------------------------------------------------------------------
# Wrapper
# ---------------------------------------------------------------------------
def moment_model_forward(obs, params, *, use_fast_path=True, use_pallas=None,
                         block_rows=1024):
    """Returns (model_out_first_moment, model_out_second_moment, memory_outs)."""
    obs = jnp.asarray(obs)
    B, d_in = obs.shape
    h1 = params["w1"].shape[1]
    h2 = params["w2"].shape[1]
    n_first = params["w_first"].shape[1]
    n_second = params["w_second"].shape[1]
    n_states = params["w_logit"].shape[1]

    if use_pallas is None:
        # A pallas custom call + DMA setup costs more than the whole model at
        # small B; let plain XLA fuse it there.
        use_pallas = B >= 1024

    wf = params["w_first"].astype(jnp.float32)    # (1, n_first)
    ws = params["w_second"].astype(jnp.float32)   # (1, n_second)
    cparams = pltpu.CompilerParams(dimension_semantics=("parallel",))

    if use_fast_path:
        # Valid only because the softmax axis has size 1 (so softmax == 1.0)
        # and the head layers have no bias -> outputs are obs-independent.
        assert n_states == 1, (
            "fast path requires amount_possible_states == 1 "
            f"(softmax over a size-1 axis); got width {n_states}")
        if not use_pallas:
            return (jnp.broadcast_to(wf, (B, n_first)),
                    jnp.broadcast_to(ws, (B, n_second)),
                    None)
        tb = _pick_row_tile(B, block_rows)
        grid = (pl.cdiv(B, tb),)
        out_first, out_second = pl.pallas_call(
            _heads_broadcast_kernel,
            out_shape=(jax.ShapeDtypeStruct((B, n_first), jnp.float32),
                       jax.ShapeDtypeStruct((B, n_second), jnp.float32)),
            grid=grid,
            in_specs=[pl.BlockSpec((1, n_first), lambda i: (0, 0)),
                      pl.BlockSpec((1, n_second), lambda i: (0, 0))],
            out_specs=(pl.BlockSpec((tb, n_first), lambda i: (i, 0)),
                       pl.BlockSpec((tb, n_second), lambda i: (i, 0))),
            compiler_params=cparams,
            cost_estimate=pl.CostEstimate(
                flops=0,
                transcendentals=0,
                bytes_accessed=4 * (B * (n_first + n_second)
                                    + n_first + n_second),
            ),
        )(wf, ws)
        return out_first, out_second, None

    # ------------------- faithful fused-MLP path -------------------
    obs_f32 = obs.astype(jnp.float32)
    w1 = params["w1"].astype(jnp.bfloat16)        # MXU-native; tiny & resident
    w2 = params["w2"].astype(jnp.bfloat16)
    b1 = params["b1"].astype(jnp.float32).reshape(1, h1)
    b2 = params["b2"].astype(jnp.float32).reshape(1, h2)
    wl_row = params["w_logit"].astype(jnp.float32).reshape(1, h2)
    bl = params["b_logit"].astype(jnp.float32).reshape((1,))

    if not use_pallas:
        a1 = jnp.tanh(obs_f32 @ params["w1"].astype(jnp.float32) + b1)
        a2 = jnp.tanh(a1 @ params["w2"].astype(jnp.float32) + b2)
        logit = a2 @ params["w_logit"].astype(jnp.float32) + bl
        sm = jax.nn.softmax(logit, axis=1)
        return sm @ wf, sm @ ws, None

    tb = _pick_row_tile(B, block_rows)
    grid = (pl.cdiv(B, tb),)
    out_first, out_second = pl.pallas_call(
        _moment_model_mlp_kernel,
        out_shape=(jax.ShapeDtypeStruct((B, n_first), jnp.float32),
                   jax.ShapeDtypeStruct((B, n_second), jnp.float32)),
        grid=grid,
        in_specs=[
            pl.BlockSpec((tb, d_in), lambda i: (i, 0)),          # obs tile
            pl.BlockSpec((d_in, h1), lambda i: (0, 0)),          # w1 (bf16)
            pl.BlockSpec((1, h1), lambda i: (0, 0)),             # b1
            pl.BlockSpec((h1, h2), lambda i: (0, 0)),            # w2 (bf16)
            pl.BlockSpec((1, h2), lambda i: (0, 0)),             # b2
            pl.BlockSpec((1, h2), lambda i: (0, 0)),             # w_logit row
            pl.BlockSpec(memory_space=pltpu.MemorySpace.SMEM),   # b_logit
            pl.BlockSpec((1, n_first), lambda i: (0, 0)),        # w_first
            pl.BlockSpec((1, n_second), lambda i: (0, 0)),       # w_second
        ],
        out_specs=(pl.BlockSpec((tb, n_first), lambda i: (i, 0)),
                   pl.BlockSpec((tb, n_second), lambda i: (i, 0))),
        compiler_params=cparams,
        cost_estimate=pl.CostEstimate(
            flops=2 * B * (d_in * h1 + h1 * h2 + h2) + B * (n_first + n_second),
            transcendentals=B * (h1 + h2 + 1),
            bytes_accessed=(4 * (B * d_in + B * (n_first + n_second))
                            + 2 * (d_in * h1 + h1 * h2)
                            + 4 * (h1 + h2 + h2 + 1 + n_first + n_second)),
        ),
    )(obs_f32, w1, b1, w2, b2, wl_row, bl, wf, ws)
    return out_first, out_second, None


# ---------------------------------------------------------------------------
# Deterministic parameter initialization (mirrors the PyTorch initializers).
# Weights stored (in_features, out_features): y = x @ W + b.
# ---------------------------------------------------------------------------
def normc_init(key, in_size, out_size, std=1.0):
    w = jax.random.normal(key, (in_size, out_size), jnp.float32)
    return w * std / jnp.sqrt(jnp.sum(jnp.square(w), axis=0, keepdims=True))


def xavier_uniform_init(key, in_size, out_size):
    limit = jnp.sqrt(6.0 / (in_size + out_size))
    return jax.random.uniform(key, (in_size, out_size), jnp.float32, -limit, limit)


def make_params(key, in_dim, hiddens, n_first, n_second):
    ks = jax.random.split(key, 6)
    hh1, hh2 = hiddens
    return {
        "w1": normc_init(ks[0], in_dim, hh1),
        "b1": jnp.zeros((1, hh1), jnp.float32),
        "w2": normc_init(ks[1], hh1, hh2),
        "b2": jnp.zeros((1, hh2), jnp.float32),
        "w_logit": xavier_uniform_init(ks[2], hh2, 1),
        "b_logit": jnp.zeros((1, 1), jnp.float32),
        "w_first": xavier_uniform_init(ks[3], 1, n_first),
        "w_second": xavier_uniform_init(ks[4], 1, n_second),
    }


if __name__ == "__main__":
    # Config mirrors the module: moment_model_input_type='obs',
    # aggregated_portfolio=False, amount_assets=4 -> n_first=4, n_second=10,
    # hiddens=[32, 32], activation=tanh, amount_possible_states=1.
    B = 8
    in_dim = 16
    hiddens = (32, 32)
    amount_assets = 4
    n_first = amount_assets
    n_second = int((amount_assets + 1) * (amount_assets / 2))  # 10

    key = jax.random.PRNGKey(0)
    k_obs, k_params = jax.random.split(key)
    obs = jax.random.normal(k_obs, (B, in_dim), jnp.float32)
    params = make_params(k_params, in_dim, hiddens, n_first, n_second)

    def reference(o, p):
        h = jnp.tanh(o @ p["w1"] + p["b1"])
        h = jnp.tanh(h @ p["w2"] + p["b2"])
        logit = h @ p["w_logit"] + p["b_logit"]
        sm = jax.nn.softmax(logit, axis=1)
        return sm @ p["w_first"], sm @ p["w_second"]

    ref_first, ref_second = reference(obs, params)

    # Pallas fast path (exact: size-1 softmax is identically 1.0).
    out_first, out_second, mem = moment_model_forward(obs, params, use_pallas=True)
    jax.block_until_ready((out_first, out_second))
    assert out_first.shape == (B, n_first)
    assert out_second.shape == (B, n_second)
    assert mem is None
    assert jnp.allclose(out_first, ref_first, atol=1e-6)
    assert jnp.allclose(out_second, ref_second, atol=1e-6)

    # Pallas faithful fused-MLP path.  Output is still exact despite bf16 MXU
    # inputs because softmax over the width-1 logit is identically 1.0.
    f_first, f_second, _ = moment_model_forward(
        obs, params, use_fast_path=False, use_pallas=True)
    jax.block_until_ready((f_first, f_second))
    assert jnp.allclose(f_first, ref_first, atol=1e-6)
    assert jnp.allclose(f_second, ref_second, atol=1e-6)

    # Ragged batch (13 rows): exercises the cdiv grid + masked last tile, and
    # the >=2-step 'parallel' batch grid (both outputs keep exact widths).
    B2 = 13
    obs2 = jax.random.normal(jax.random.PRNGKey(1), (B2, in_dim), jnp.float32)
    r1, r2 = reference(obs2, params)
    for fast in (True, False):
        o1, o2, _ = moment_model_forward(obs2, params, use_fast_path=fast,
                                         use_pallas=True)
        jax.block_until_ready((o1, o2))
        assert o1.shape == (B2, n_first) and o2.shape == (B2, n_second)
        assert jnp.allclose(o1, r1, atol=1e-6)
        assert jnp.allclose(o2, r2, atol=1e-6)

    # Auto gate: tiny batches skip the custom call (plain XLA broadcast);
    # larger batches take the Pallas kernel with a multi-step grid.
    g1, g2, _ = moment_model_forward(obs, params)          # B=8 -> plain JAX
    jax.block_until_ready((g1, g2))
    assert jnp.allclose(g1, ref_first, atol=1e-6)
    assert jnp.allclose(g2, ref_second, atol=1e-6)

    B3 = 2048
    obs3 = jnp.zeros((B3, in_dim), jnp.float32)
    big1, big2, _ = moment_model_forward(obs3, params)     # -> Pallas, 2 steps
    jax.block_until_ready((big1, big2))
    assert big1.shape == (B3, n_first) and big2.shape == (B3, n_second)
    assert jnp.allclose(big1[0], ref_first[0], atol=1e-6)
    assert jnp.allclose(big2[0], ref_second[0], atol=1e-6)

    print("KERNEL_OK")
</pallas_src>

<mosaic_0001>
module attributes {stable_mosaic.version = 11 : i64} {
  func.func @_heads_broadcast_kernel(%arg0: i32, %arg1: memref<1x4xf32, #tpu.memory_space<vmem>>, %arg2: memref<1x10xf32, #tpu.memory_space<vmem>>, %arg3: memref<8x4xf32, #tpu.memory_space<vmem>>, %arg4: memref<8x10xf32, #tpu.memory_space<vmem>>) attributes {dimension_semantics = [#tpu.dimension_semantics<parallel>], iteration_bounds = array<i64: 1>, scalar_prefetch = 0 : i64, scratch_operands = 0 : i64, tpu.core_type = #tpu.core_type<tc>, window_params = [{pipeline_mode = #tpu.pipeline_mode<synchronous>, transform_indices = @transform_0, window_bounds = array<i64: 1, 4>}, {pipeline_mode = #tpu.pipeline_mode<synchronous>, transform_indices = @transform_1, window_bounds = array<i64: 1, 10>}, {transform_indices = @transform_2, window_bounds = array<i64: 8, 4>}, {transform_indices = @transform_3, window_bounds = array<i64: 8, 10>}]} {
    %c0 = arith.constant 0 : index
    %c0_0 = arith.constant 0 : index
    %0 = vector.load %arg1[%c0, %c0_0] : memref<1x4xf32, #tpu.memory_space<vmem>>, vector<1x4xf32>
    %1 = vector.shape_cast %0 : vector<1x4xf32> to vector<1x4xf32>
    %2 = vector.broadcast %1 : vector<1x4xf32> to vector<8x4xf32>
    %c0_1 = arith.constant 0 : index
    %c0_2 = arith.constant 0 : index
    %3 = vector.load %arg3[%c0_1, %c0_2] : memref<8x4xf32, #tpu.memory_space<vmem>>, vector<8x4xf32>
    tpu.vector_store %arg3[%c0_1, %c0_2], %2 {strides = array<i32>} : memref<8x4xf32, #tpu.memory_space<vmem>>, vector<8x4xf32>,
    %c0_3 = arith.constant 0 : index
    %c0_4 = arith.constant 0 : index
    %4 = vector.load %arg2[%c0_3, %c0_4] : memref<1x10xf32, #tpu.memory_space<vmem>>, vector<1x10xf32>
    %5 = vector.shape_cast %4 : vector<1x10xf32> to vector<1x10xf32>
    %6 = vector.broadcast %5 : vector<1x10xf32> to vector<8x10xf32>
    %c0_5 = arith.constant 0 : index
    %c0_6 = arith.constant 0 : index
    %7 = vector.load %arg4[%c0_5, %c0_6] : memref<8x10xf32, #tpu.memory_space<vmem>>, vector<8x10xf32>
    tpu.vector_store %arg4[%c0_5, %c0_6], %6 {strides = array<i32>} : memref<8x10xf32, #tpu.memory_space<vmem>>, vector<8x10xf32>,
    return
  }
  func.func @transform_0(%arg0: i32) -> (i32, i32) {
    %c0_i32 = arith.constant 0 : i32
    %c0_i32_0 = arith.constant 0 : i32
    %c0_i32_1 = arith.constant 0 : i32
    return %c0_i32, %c0_i32_0 : i32, i32
  }
  func.func @transform_1(%arg0: i32) -> (i32, i32) {
    %c0_i32 = arith.constant 0 : i32
    %c0_i32_0 = arith.constant 0 : i32
    %c0_i32_1 = arith.constant 0 : i32
    return %c0_i32, %c0_i32_0 : i32, i32
  }
  func.func @transform_2(%arg0: i32) -> (i32, i32) {
    %c0_i32 = arith.constant 0 : i32
    %c0_i32_0 = arith.constant 0 : i32
    return %arg0, %c0_i32 : i32, i32
  }
  func.func @transform_3(%arg0: i32) -> (i32, i32) {
    %c0_i32 = arith.constant 0 : i32
    %c0_i32_0 = arith.constant 0 : i32
    return %arg0, %c0_i32 : i32, i32
  }
}

</mosaic_0001>

<llo_original>
// kernel: tpu_custom_call.1
$region0: #{tpu_custom_call.1}
  #allocation0 [shape = 'u32[]', space=smem, size = 0x4, offset = 0x4, fixed_abs, tag = 'smem constant byte address 0x4 - core index']
  #allocation1 [shape = 'u32[72,128]{1,0:T(1,128)}', space=vmem, size = 0x9000, scoped, tag = 'internal scratch']
  %s0 = inlined_call_operand.hbm [shape: f32[1,4], index: 0, kind: input, shape index: {}]
  %s1 = inlined_call_operand.hbm [shape: f32[1,10], index: 1, kind: input, shape index: {}]
  %s2 = inlined_call_operand.vmem [shape: f32[8,4], index: 2, kind: output, shape index: {0}]
  %s3 = inlined_call_operand.hbm [shape: f32[8,10], index: 3, kind: output, shape index: {1}]
  %4 = xla_tuple %s2, %s3
  %s5 = sld [smem:[#allocation0]]
  $region34: #{tpu_custom_call.1} parent=0
    _
  %s7 = ssub.s32 1, %s5
  %s8 = scalar_select 0, %s7, %s5
  $region1: #{tpu_custom_call.1} parent=0
    #allocation2 [shape = 'u8[512]{0}', space=vmem, size = 0x400, scoped, tag = 'input window, operand 0, single buffered']
    #allocation3 [shape = 's32[1]{0}', space=sflag, size = 0x4, scoped, tag = 'scoped memory for tpu_custom_call.1']
    #allocation4 [shape = 's32[1]{0}', space=sflag, size = 0x4, scoped, tag = 'scoped memory for tpu_custom_call.1']
    #allocation5 [shape = 'u8[512]{0}', space=vmem, size = 0x400, scoped, tag = 'input window, operand 1, single buffered']
    #allocation6 [shape = 's32[1]{0}', space=sflag, size = 0x4, scoped, tag = 'scoped memory for tpu_custom_call.1']
    #allocation7 [shape = 'u8[4096]{0}', space=vmem, size = 0x1000, scoped, tag = 'output window, operand 1, single buffered']
    %9 = vsyncpa [#allocation3], 0
    %10 = vsyncpa [#allocation6], 0
    %11 = vsyncpa [#allocation4], 0
    // Predicated region
    $region2: #{tpu_custom_call.1} parent=1 // pred_check
      _
    $region3: #{tpu_custom_call.1} parent=1 // pred_check_branch
      %13 = sbr.rel (0) target = $region5
    $region4: #{tpu_custom_call.1} parent=1 // pred_region
      %15 = vsyncadd [#allocation3], 0
      %s17 = sshll.u32 %s0, 4
      %s18 = int_to_ptr.hbm [resolvable:$true] %s17
      %s19 = sshll.u32 [#allocation2], 4
      %s20 = int_to_ptr.vmem [resolvable:$true] %s19
      %22 = dma.hbm_to_vmem [thread:$0]  %s18, 16, %s20, [#allocation3]
    $region5: #{tpu_custom_call.1} parent=1 // pred_fallthru
      _
    // Predicated region
    $region6: #{tpu_custom_call.1} parent=1 // pred_check
      _
    $region7: #{tpu_custom_call.1} parent=1 // pred_check_branch
      %24 = sbr.rel (0) target = $region9
    $region8: #{tpu_custom_call.1} parent=1 // pred_region
      %26 = vsyncadd [#allocation6], 0
      %s28 = sshll.u32 %s1, 4
      %s29 = int_to_ptr.hbm [resolvable:$true] %s28
      %s30 = sshll.u32 [#allocation5], 4
      %s31 = int_to_ptr.vmem [resolvable:$true] %s30
      %33 = dma.hbm_to_vmem [thread:$0]  %s29, 16, %s31, [#allocation6]
    $region9: #{tpu_custom_call.1} parent=1 // pred_fallthru
      _
    // Predicated region
    $region10: #{tpu_custom_call.1} parent=1 // pred_check
      _
    $region11: #{tpu_custom_call.1} parent=1 // pred_check_branch
      %35 = sbr.rel (0) target = $region13
    $region12: #{tpu_custom_call.1} parent=1 // pred_region
      %37 = dma.done [#allocation3], 16
    $region13: #{tpu_custom_call.1} parent=1 // pred_fallthru
      _
    // Predicated region
    $region14: #{tpu_custom_call.1} parent=1 // pred_check
      _
    $region15: #{tpu_custom_call.1} parent=1 // pred_check_branch
      %39 = sbr.rel (0) target = $region17
    $region16: #{tpu_custom_call.1} parent=1 // pred_region
      %41 = dma.done [#allocation6], 16
    $region17: #{tpu_custom_call.1} parent=1 // pred_fallthru
      _
    %v42 = vld [vmem:[#allocation2] sm:$0x1]
    %v44 = vperm.slane %v42, 0
    %vm46 = vcmask 31744
    %47 = vst.msk [vmem:[%s2] sm:$0xff] %vm46, %v44
    %v48 = vld [vmem:[#allocation5] sm:$0x1]
    %v50 = vperm.slane %v48, 0
    %vm52 = vcmask 80896
    %53 = vst.msk [vmem:[#allocation7] sm:$0xff] %vm52, %v50
    // Predicated region
    $region18: #{tpu_custom_call.1} parent=1 // pred_check
      _
    $region19: #{tpu_custom_call.1} parent=1 // pred_check_branch
      %55 = sbr.rel (0) target = $region21
    $region20: #{tpu_custom_call.1} parent=1 // pred_region
      _
    $region21: #{tpu_custom_call.1} parent=1 // pred_fallthru
      _
    // Predicated region
    $region22: #{tpu_custom_call.1} parent=1 // pred_check
      _
    $region23: #{tpu_custom_call.1} parent=1 // pred_check_branch
      %57 = sbr.rel (0) target = $region25
    $region24: #{tpu_custom_call.1} parent=1 // pred_region
      %59 = vsyncadd [#allocation4], 0
      %s61 = sshll.u32 [#allocation7], 4
      %s62 = int_to_ptr.vmem [resolvable:$true] %s61
      %s63 = sshll.u32 %s3, 4
      %s64 = int_to_ptr.hbm [resolvable:$true] %s63
      %66 = dma.vmem_to_hbm [thread:$0]  %s62, 128, %s64, [#allocation4]
    $region25: #{tpu_custom_call.1} parent=1 // pred_fallthru
      _
    // Predicated region
    $region26: #{tpu_custom_call.1} parent=1 // pred_check
      _
    $region27: #{tpu_custom_call.1} parent=1 // pred_check_branch
      %68 = sbr.rel (0) target = $region29
    $region28: #{tpu_custom_call.1} parent=1 // pred_region
      _
    $region29: #{tpu_custom_call.1} parent=1 // pred_fallthru
      _
    // Predicated region
    $region30: #{tpu_custom_call.1} parent=1 // pred_check
      _
    $region31: #{tpu_custom_call.1} parent=1 // pred_check_branch
      %70 = sbr.rel (0) target = $region33
    $region32: #{tpu_custom_call.1} parent=1 // pred_region
      %72 = dma.done [#allocation4], 128
    $region33: #{tpu_custom_call.1} parent=1 // pred_fallthru
      _
    %73 = vsyncpa [#allocation3], 1
    %74 = vsyncpa [#allocation6], 1
    %75 = vsyncpa [#allocation4], 1

</llo_original>
